<compile_context>
chip_gen: v6e
topology: v6e:2x2x1
jax: 0.10.0
libtpu: 0.0.40
codegen_flags: <defaults>
</compile_context>

<pallas_src>
import jax
import jax.numpy as jnp
from jax.experimental import pallas as pl
from jax.experimental.pallas import tpu as pltpu


def _round_up(x, m):
    return (x + m - 1) // m * m


def _vmem_config():
    """Returns (VMEM tile budget for block_b sizing, vmem_limit_bytes or None)."""
    try:
        kind = jax.devices()[0].device_kind.lower()
    except Exception:
        kind = ""
    if "v7" in kind or "7x" in kind:
        return 40 << 20, 56 << 20          # v7x: 64 MiB physical VMEM per TensorCore
    if "v2" in kind or "v3" in kind:
        return 10 << 20, None              # small VMEM; keep the default scoped limit
    return 80 << 20, 100 << 20             # v4 / v5e / v6e: 128 MiB physical


def _choose_block_b(B, Tp, Hgp, Hlp, Lp, tile_budget):
    """Largest batch tile (multiple of 8) whose working set fits the VMEM budget."""
    per_sample = (2 * Tp * Hgp * 2         # enc tile (bf16), double buffered
                  + 2 * Tp * 4             # token-mask tile (f32), double buffered
                  + 2 * Lp * 4             # logits tile (f32), double buffered
                  + Tp * Hgp * 4           # W1-GEMM output / h2 temp (f32)
                  + Tp * Hgp * 4           # a * enc f32 temp before the sublane reduce
                  + 16 * Tp * 4)           # scores / softmax temporaries (generous)
    weights = 2 * ((Hgp * Hgp + Hgp * Hlp + Hlp * Lp) * 2     # bf16 weights (x2 buffers)
                   + (2 * Hgp + Hlp + Lp) * 4)                # f32 biases + w2
    avail = max(tile_budget - weights, 8 * per_sample)
    bb = max(8, (avail // per_sample) // 8 * 8)
    bb = min(bb, 256)
    if B > 8:                              # >= 2 grid steps -> both v7x TensorCores
        bb = min(bb, _round_up((B + 1) // 2, 8))
    bb = min(bb, _round_up(B, 8))
    return int(bb)


def _text2label_kernel(enc_ref, mask_ref,
                       w1_ref, b1_ref, w2_ref,
                       wm_ref, bm_ref, wc_ref, bc_ref,
                       logits_ref):
    f32, bf16 = jnp.float32, jnp.bfloat16
    Bt, Tp, Hg = enc_ref.shape

    x3 = enc_ref[...]                                    # (Bt, Tp, Hg) bf16
    x2 = x3.reshape(Bt * Tp, Hg)                         # layout-free merge (Tp%8==0, Hg%128==0)

    # ---- PoolingFunction('attentive-pooling'): e = V(tanh(W x)) ----
    g = jnp.dot(x2, w1_ref[...], preferred_element_type=f32) + b1_ref[...]    # (Bt*Tp, Hg) f32
    h3 = jnp.tanh(g.astype(bf16)).reshape(Bt, Tp, Hg)    # bf16 tanh: EUP-throughput path
    # attention scores, lane-dense over time; contraction over Hg upcast to f32.
    # (The attention-score bias b2 is omitted: softmax is shift-invariant.)
    e = jnp.sum(h3.astype(f32) * w2_ref[...], axis=-1)   # (Bt, Tp)

    # masked softmax over time (time on lanes), all f32
    m = mask_ref[...]                                    # (Bt, Tp) 1=valid, 0=pad
    e = e + (1.0 - m) * (-1e20)
    e = e - jnp.max(e, axis=-1, keepdims=True)
    p = jnp.exp(e)
    a = p * pl.reciprocal(jnp.sum(p, axis=-1, keepdims=True), approx=False)   # (Bt, Tp)

    # pooled[b] = sum_t a[b,t] * x[b,t,:]  — VPU multiply + sublane reduce (an M=1
    # batched matmul would use 1/128 of the MXU rows and serialize its result path).
    pooled = jnp.sum(a[:, :, None] * x3.astype(f32), axis=1)                  # (Bt, Hg) f32

    # mapping_function: Linear(Hg, Hl) + Tanh   (gnn_hidden_size != lstm_hidden_size)
    h0 = jnp.tanh(jnp.dot(pooled.astype(bf16), wm_ref[...],
                          preferred_element_type=f32) + bm_ref[...])          # (Bt, Hl) f32

    # ---- multi_label_cls head: logits, stored lane-dense (Lp multiple of 128) ----
    logits_ref[...] = (jnp.dot(h0.astype(bf16), wc_ref[...],
                               preferred_element_type=f32) + bc_ref[...])     # (Bt, Lp)


def text2label_forward(enc, mask, labels, params, *, block_b=None):
    """enc: (B, T, Hg) f32, mask: (B, T) {0,1}, labels: (B, L) {0,1}.

    Returns (logits[B, L] f32, scalar BCE-with-logits mean loss). The original module's
    gp_loss comes from the graph encoder and is treated as 0 here.
    """
    f32, bf16 = jnp.float32, jnp.bfloat16
    B, T, Hg = enc.shape
    Hl = params['wm'].shape[1]
    L = params['wc'].shape[1]

    Tp = _round_up(T, 8)                      # sublane-aligned time (padding is masked)
    Hgp = _round_up(Hg, 128)                  # full lane / MXU K,N occupancy
    Hlp = _round_up(Hl, 128)
    Lp = _round_up(L, 128)                    # lane-dense logits

    tile_budget, vmem_limit = _vmem_config()
    if block_b is None:
        block_b = _choose_block_b(B, Tp, Hgp, Hlp, Lp, tile_budget)
    block_b = max(8, _round_up(block_b, 8))
    B_pad = _round_up(B, block_b)
    G = B_pad // block_b

    enc_p = jnp.pad(enc, ((0, B_pad - B), (0, Tp - T), (0, Hgp - Hg))).astype(bf16)
    mask_p = jnp.pad(mask.astype(f32), ((0, B_pad - B), (0, Tp - T)))
    w1_p = jnp.pad(params['w1'], ((0, Hgp - Hg), (0, Hgp - Hg))).astype(bf16)
    b1_p = jnp.pad(params['b1'].astype(f32), ((0, 0), (0, Hgp - Hg)))
    w2_p = jnp.pad(params['w2'].astype(f32), ((0, 0), (0, Hgp - Hg)))
    wm_p = jnp.pad(params['wm'], ((0, Hgp - Hg), (0, Hlp - Hl))).astype(bf16)
    bm_p = jnp.pad(params['bm'].astype(f32), ((0, 0), (0, Hlp - Hl)))
    wc_p = jnp.pad(params['wc'], ((0, Hlp - Hl), (0, Lp - L))).astype(bf16)
    bc_p = jnp.pad(params['bc'].astype(f32), ((0, 0), (0, Lp - L)))

    flops = (2 * B_pad * Tp * Hgp * Hgp           # W1 GEMM
             + 4 * B_pad * Tp * Hgp               # score reduce + pooling
             + 2 * B_pad * Hgp * Hlp + 2 * B_pad * Hlp * Lp)
    transcendentals = B_pad * Tp * Hgp + B_pad * Tp + B_pad * Hlp
    bytes_accessed = int(enc_p.size * 2 + mask_p.size * 4
                         + (w1_p.size + wm_p.size + wc_p.size) * 2
                         + (b1_p.size + w2_p.size + bm_p.size + bc_p.size) * 4
                         + B_pad * Lp * 4)

    cp_kwargs = dict(dimension_semantics=("parallel",))
    if vmem_limit is not None:
        cp_kwargs["vmem_limit_bytes"] = int(vmem_limit)

    def const(shape):
        # Grid-invariant operand (weights / biases): block index never changes.
        # TODO(synk): pipeline_mode=pl.Buffered(1) here would drop the second pipeline
        # buffer for these constant tiles (VMEM win on v7x); omitted for lowering
        # portability across jax versions.
        return pl.BlockSpec(shape, lambda i: (0,) * len(shape))

    logits_p = pl.pallas_call(
        _text2label_kernel,
        out_shape=jax.ShapeDtypeStruct((B_pad, Lp), f32),
        grid=(G,),
        in_specs=[
            pl.BlockSpec((block_b, Tp, Hgp), lambda i: (i, 0, 0)),  # encodings (bf16)
            pl.BlockSpec((block_b, Tp), lambda i: (i, 0)),          # token mask (f32)
            const((Hgp, Hgp)),                                      # attn W1 (bf16)
            const((1, Hgp)),                                        # attn b1 (f32)
            const((1, Hgp)),                                        # attn W2 row vec (f32)
            const((Hgp, Hlp)),                                      # mapping W (bf16)
            const((1, Hlp)),                                        # mapping b (f32)
            const((Hlp, Lp)),                                       # classifier W (bf16)
            const((1, Lp)),                                         # classifier b (f32)
        ],
        out_specs=pl.BlockSpec((block_b, Lp), lambda i: (i, 0)),    # lane-dense logits
        compiler_params=pltpu.CompilerParams(**cp_kwargs),
        cost_estimate=pl.CostEstimate(flops=int(flops),
                                      transcendentals=int(transcendentals),
                                      bytes_accessed=bytes_accessed),
    )(enc_p, mask_p, w1_p, b1_p, w2_p, wm_p, bm_p, wc_p, bc_p)

    logits = logits_p[:B, :L]
    # BCE-with-logits (tiny, elementwise) from the f32 logits; mean over (B, L).
    y = labels.astype(f32)
    bce = jnp.maximum(logits, 0.0) - logits * y + jnp.log1p(jnp.exp(-jnp.abs(logits)))
    loss = jnp.mean(bce)
    return logits, loss


def reference_forward(enc, mask, labels, params):
    """Pure-JAX reference (mirrors the PyTorch PoolingFunction + linear head), f32."""
    maskf = mask.astype(jnp.float32)
    h = jnp.tanh(jnp.einsum('bth,hk->btk', enc, params['w1']) + params['b1'])
    e = jnp.einsum('btk,k->bt', h, params['w2'][0]) + params['b2'][0, 0]
    e = e + (1.0 - maskf) * (-1e20)
    a = jax.nn.softmax(e, axis=1)
    pooled = jnp.einsum('bt,bth->bh', a, enc)
    h0 = jnp.tanh(pooled @ params['wm'] + params['bm'])
    logits = h0 @ params['wc'] + params['bc']
    loss = jnp.mean(jnp.maximum(logits, 0.0) - logits * labels
                    + jnp.log1p(jnp.exp(-jnp.abs(logits))))
    return logits, loss


if __name__ == "__main__":
    # small shapes: batch=4, seq=8, gnn_hidden=32, lstm_hidden=64, num_labels=16
    B, T, Hg, Hl, L = 4, 8, 32, 64, 16
    key = jax.random.PRNGKey(0)
    ks = jax.random.split(key, 10)

    enc = jax.random.normal(ks[0], (B, T, Hg), jnp.float32)
    lengths = jnp.array([8, 5, 7, 3], jnp.int32)
    mask = (jnp.arange(T)[None, :] < lengths[:, None]).astype(jnp.float32)
    labels = (jax.random.uniform(ks[1], (B, L)) > 0.5).astype(jnp.float32)

    params = {
        'w1': 0.1 * jax.random.normal(ks[2], (Hg, Hg), jnp.float32),
        'b1': 0.1 * jax.random.normal(ks[3], (1, Hg), jnp.float32),
        'w2': 0.1 * jax.random.normal(ks[4], (1, Hg), jnp.float32),
        'b2': 0.1 * jax.random.normal(ks[5], (1, 1), jnp.float32),
        'wm': 0.1 * jax.random.normal(ks[6], (Hg, Hl), jnp.float32),
        'bm': 0.1 * jax.random.normal(ks[7], (1, Hl), jnp.float32),
        'wc': 0.1 * jax.random.normal(ks[8], (Hl, L), jnp.float32),
        'bc': 0.1 * jax.random.normal(ks[9], (1, L), jnp.float32),
    }

    # TODO(synk): the LGESQL RGAT graph encoder (`encoder_text2sql`) and its graph-pruning
    # auxiliary loss operate on batched graph objects and have no clean Pallas equivalent;
    # the kernel consumes the encoder's outputs (encodings, mask) and treats gp_loss as 0.
    logits, loss = text2label_forward(enc, mask, labels, params)
    jax.block_until_ready((logits, loss))

    ref_logits, ref_loss = reference_forward(enc, mask, labels, params)
    # bf16 inputs/weights on the GEMM path -> relaxed tolerance vs the f32 reference.
    assert jnp.allclose(logits, ref_logits, atol=3e-2, rtol=3e-2), \
        float(jnp.max(jnp.abs(logits - ref_logits)))
    assert jnp.allclose(loss, ref_loss, atol=1e-2, rtol=1e-2), (float(loss), float(ref_loss))

    print("KERNEL_OK")
</pallas_src>

<mosaic_0001>
module attributes {stable_mosaic.version = 11 : i64} {
  func.func @_text2label_kernel(%arg0: i32, %arg1: memref<8x8x128xbf16, #tpu.memory_space<vmem>>, %arg2: memref<8x8xf32, #tpu.memory_space<vmem>>, %arg3: memref<128x128xbf16, #tpu.memory_space<vmem>>, %arg4: memref<1x128xf32, #tpu.memory_space<vmem>>, %arg5: memref<1x128xf32, #tpu.memory_space<vmem>>, %arg6: memref<128x128xbf16, #tpu.memory_space<vmem>>, %arg7: memref<1x128xf32, #tpu.memory_space<vmem>>, %arg8: memref<128x128xbf16, #tpu.memory_space<vmem>>, %arg9: memref<1x128xf32, #tpu.memory_space<vmem>>, %arg10: memref<8x128xf32, #tpu.memory_space<vmem>>) attributes {dimension_semantics = [#tpu.dimension_semantics<parallel>], iteration_bounds = array<i64: 1>, scalar_prefetch = 0 : i64, scratch_operands = 0 : i64, tpu.core_type = #tpu.core_type<tc>, window_params = [{transform_indices = @transform_0, window_bounds = array<i64: 8, 8, 128>}, {transform_indices = @transform_1, window_bounds = array<i64: 8, 8>}, {pipeline_mode = #tpu.pipeline_mode<synchronous>, transform_indices = @transform_2, window_bounds = array<i64: 128, 128>}, {pipeline_mode = #tpu.pipeline_mode<synchronous>, transform_indices = @transform_3, window_bounds = array<i64: 1, 128>}, {pipeline_mode = #tpu.pipeline_mode<synchronous>, transform_indices = @transform_4, window_bounds = array<i64: 1, 128>}, {pipeline_mode = #tpu.pipeline_mode<synchronous>, transform_indices = @transform_5, window_bounds = array<i64: 128, 128>}, {pipeline_mode = #tpu.pipeline_mode<synchronous>, transform_indices = @transform_6, window_bounds = array<i64: 1, 128>}, {pipeline_mode = #tpu.pipeline_mode<synchronous>, transform_indices = @transform_7, window_bounds = array<i64: 128, 128>}, {pipeline_mode = #tpu.pipeline_mode<synchronous>, transform_indices = @transform_8, window_bounds = array<i64: 1, 128>}, {transform_indices = @transform_9, window_bounds = array<i64: 8, 128>}]} {
    %c0 = arith.constant 0 : index
    %c0_0 = arith.constant 0 : index
    %c0_1 = arith.constant 0 : index
    %0 = vector.load %arg1[%c0, %c0_0, %c0_1] : memref<8x8x128xbf16, #tpu.memory_space<vmem>>, vector<8x8x128xbf16>
    %1 = vector.shape_cast %0 : vector<8x8x128xbf16> to vector<64x128xbf16>
    %c0_2 = arith.constant 0 : index
    %c0_3 = arith.constant 0 : index
    %2 = vector.load %arg3[%c0_2, %c0_3] : memref<128x128xbf16, #tpu.memory_space<vmem>>, vector<128x128xbf16>
    %cst = arith.constant dense<0.000000e+00> : vector<64x128xf32>
    %3 = tpu.matmul %1, %2, %cst {dimension_numbers = #tpu.dot_dimension_numbers<[1], [0], [0], [1], [0, 0, 1, 1], [], []>} : vector<64x128xbf16>, vector<128x128xbf16>, vector<64x128xf32> -> vector<64x128xf32>
    %c0_4 = arith.constant 0 : index
    %c0_5 = arith.constant 0 : index
    %4 = vector.load %arg4[%c0_4, %c0_5] : memref<1x128xf32, #tpu.memory_space<vmem>>, vector<1x128xf32>
    %5 = vector.broadcast %4 : vector<1x128xf32> to vector<64x128xf32>
    %6 = arith.addf %3, %5 : vector<64x128xf32>
    %7 = arith.truncf %6 : vector<64x128xf32> to vector<64x128xbf16>
    %8 = math.tanh %7 : vector<64x128xbf16>
    %9 = vector.shape_cast %8 : vector<64x128xbf16> to vector<8x8x128xbf16>
    %10 = arith.extf %9 : vector<8x8x128xbf16> to vector<8x8x128xf32>
    %c0_6 = arith.constant 0 : index
    %c0_7 = arith.constant 0 : index
    %11 = vector.load %arg5[%c0_6, %c0_7] : memref<1x128xf32, #tpu.memory_space<vmem>>, vector<1x128xf32>
    %12 = vector.shape_cast %11 : vector<1x128xf32> to vector<1x1x128xf32>
    %13 = vector.broadcast %12 : vector<1x1x128xf32> to vector<8x8x128xf32>
    %14 = arith.mulf %10, %13 : vector<8x8x128xf32>
    %cst_8 = arith.constant dense<0.000000e+00> : vector<8x8xf32>
    %15 = vector.multi_reduction <add>, %14, %cst_8 [2] : vector<8x8x128xf32> to vector<8x8xf32>
    %c0_9 = arith.constant 0 : index
    %c0_10 = arith.constant 0 : index
    %16 = vector.load %arg2[%c0_9, %c0_10] : memref<8x8xf32, #tpu.memory_space<vmem>>, vector<8x8xf32>
    %cst_11 = arith.constant 1.000000e+00 : f32
    %17 = vector.broadcast %cst_11 : f32 to vector<8x8xf32>
    %18 = arith.subf %17, %16 : vector<8x8xf32>
    %cst_12 = arith.constant -1.000000e+20 : f32
    %19 = vector.broadcast %cst_12 : f32 to vector<8x8xf32>
    %20 = arith.mulf %18, %19 : vector<8x8xf32>
    %21 = arith.addf %15, %20 : vector<8x8xf32>
    %cst_13 = arith.constant dense<0xFF800000> : vector<8xf32>
    %22 = vector.multi_reduction <maximumf>, %21, %cst_13 [1] : vector<8x8xf32> to vector<8xf32>
    %23 = vector.shape_cast %22 : vector<8xf32> to vector<8x1xf32>
    %24 = vector.broadcast %23 : vector<8x1xf32> to vector<8x8xf32>
    %25 = arith.subf %21, %24 : vector<8x8xf32>
    %26 = math.exp %25 : vector<8x8xf32>
    %cst_14 = arith.constant dense<0.000000e+00> : vector<8xf32>
    %27 = vector.multi_reduction <add>, %26, %cst_14 [1] : vector<8x8xf32> to vector<8xf32>
    %28 = vector.shape_cast %27 : vector<8xf32> to vector<8x1xf32>
    %29 = tpu.reciprocal %28 : vector<8x1xf32> -> vector<8x1xf32>
    %30 = vector.broadcast %29 : vector<8x1xf32> to vector<8x8xf32>
    %31 = arith.mulf %26, %30 : vector<8x8xf32>
    %32 = vector.shape_cast %31 : vector<8x8xf32> to vector<8x8x1xf32>
    %33 = arith.extf %0 : vector<8x8x128xbf16> to vector<8x8x128xf32>
    %34 = vector.broadcast %32 : vector<8x8x1xf32> to vector<8x8x128xf32>
    %35 = arith.mulf %34, %33 : vector<8x8x128xf32>
    %cst_15 = arith.constant dense<0.000000e+00> : vector<8x128xf32>
    %36 = vector.multi_reduction <add>, %35, %cst_15 [1] : vector<8x8x128xf32> to vector<8x128xf32>
    %37 = arith.truncf %36 : vector<8x128xf32> to vector<8x128xbf16>
    %c0_16 = arith.constant 0 : index
    %c0_17 = arith.constant 0 : index
    %38 = vector.load %arg6[%c0_16, %c0_17] : memref<128x128xbf16, #tpu.memory_space<vmem>>, vector<128x128xbf16>
    %cst_18 = arith.constant dense<0.000000e+00> : vector<8x128xf32>
    %39 = tpu.matmul %37, %38, %cst_18 {dimension_numbers = #tpu.dot_dimension_numbers<[1], [0], [0], [1], [0, 0, 1, 1], [], []>} : vector<8x128xbf16>, vector<128x128xbf16>, vector<8x128xf32> -> vector<8x128xf32>
    %c0_19 = arith.constant 0 : index
    %c0_20 = arith.constant 0 : index
    %40 = vector.load %arg7[%c0_19, %c0_20] : memref<1x128xf32, #tpu.memory_space<vmem>>, vector<1x128xf32>
    %41 = vector.broadcast %40 : vector<1x128xf32> to vector<8x128xf32>
    %42 = arith.addf %39, %41 : vector<8x128xf32>
    %43 = math.tanh %42 : vector<8x128xf32>
    %44 = arith.truncf %43 : vector<8x128xf32> to vector<8x128xbf16>
    %c0_21 = arith.constant 0 : index
    %c0_22 = arith.constant 0 : index
    %45 = vector.load %arg8[%c0_21, %c0_22] : memref<128x128xbf16, #tpu.memory_space<vmem>>, vector<128x128xbf16>
    %cst_23 = arith.constant dense<0.000000e+00> : vector<8x128xf32>
    %46 = tpu.matmul %44, %45, %cst_23 {dimension_numbers = #tpu.dot_dimension_numbers<[1], [0], [0], [1], [0, 0, 1, 1], [], []>} : vector<8x128xbf16>, vector<128x128xbf16>, vector<8x128xf32> -> vector<8x128xf32>
    %c0_24 = arith.constant 0 : index
    %c0_25 = arith.constant 0 : index
    %47 = vector.load %arg9[%c0_24, %c0_25] : memref<1x128xf32, #tpu.memory_space<vmem>>, vector<1x128xf32>
    %48 = vector.broadcast %47 : vector<1x128xf32> to vector<8x128xf32>
    %49 = arith.addf %46, %48 : vector<8x128xf32>
    %c0_26 = arith.constant 0 : index
    %c0_27 = arith.constant 0 : index
    %50 = vector.load %arg10[%c0_26, %c0_27] : memref<8x128xf32, #tpu.memory_space<vmem>>, vector<8x128xf32>
    tpu.vector_store %arg10[%c0_26, %c0_27], %49 {strides = array<i32>} : memref<8x128xf32, #tpu.memory_space<vmem>>, vector<8x128xf32>,
    return
  }
  func.func @transform_0(%arg0: i32) -> (i32, i32, i32) {
    %c0_i32 = arith.constant 0 : i32
    %c0_i32_0 = arith.constant 0 : i32
    %c0_i32_1 = arith.constant 0 : i32
    return %arg0, %c0_i32, %c0_i32_0 : i32, i32, i32
  }
  func.func @transform_1(%arg0: i32) -> (i32, i32) {
    %c0_i32 = arith.constant 0 : i32
    %c0_i32_0 = arith.constant 0 : i32
    return %arg0, %c0_i32 : i32, i32
  }
  func.func @transform_2(%arg0: i32) -> (i32, i32) {
    %c0_i32 = arith.constant 0 : i32
    %c0_i32_0 = arith.constant 0 : i32
    %c0_i32_1 = arith.constant 0 : i32
    return %c0_i32, %c0_i32_0 : i32, i32
  }
  func.func @transform_3(%arg0: i32) -> (i32, i32) {
    %c0_i32 = arith.constant 0 : i32
    %c0_i32_0 = arith.constant 0 : i32
    %c0_i32_1 = arith.constant 0 : i32
    return %c0_i32, %c0_i32_0 : i32, i32
  }
  func.func @transform_4(%arg0: i32) -> (i32, i32) {
    %c0_i32 = arith.constant 0 : i32
    %c0_i32_0 = arith.constant 0 : i32
    %c0_i32_1 = arith.constant 0 : i32
    return %c0_i32, %c0_i32_0 : i32, i32
  }
  func.func @transform_5(%arg0: i32) -> (i32, i32) {
    %c0_i32 = arith.constant 0 : i32
    %c0_i32_0 = arith.constant 0 : i32
    %c0_i32_1 = arith.constant 0 : i32
    return %c0_i32, %c0_i32_0 : i32, i32
  }
  func.func @transform_6(%arg0: i32) -> (i32, i32) {
    %c0_i32 = arith.constant 0 : i32
    %c0_i32_0 = arith.constant 0 : i32
    %c0_i32_1 = arith.constant 0 : i32
    return %c0_i32, %c0_i32_0 : i32, i32
  }
  func.func @transform_7(%arg0: i32) -> (i32, i32) {
    %c0_i32 = arith.constant 0 : i32
    %c0_i32_0 = arith.constant 0 : i32
    %c0_i32_1 = arith.constant 0 : i32
    return %c0_i32, %c0_i32_0 : i32, i32
  }
  func.func @transform_8(%arg0: i32) -> (i32, i32) {
    %c0_i32 = arith.constant 0 : i32
    %c0_i32_0 = arith.constant 0 : i32
    %c0_i32_1 = arith.constant 0 : i32
    return %c0_i32, %c0_i32_0 : i32, i32
  }
  func.func @transform_9(%arg0: i32) -> (i32, i32) {
    %c0_i32 = arith.constant 0 : i32
    %c0_i32_0 = arith.constant 0 : i32
    return %arg0, %c0_i32 : i32, i32
  }
}

</mosaic_0001>

<llo_original>
// kernel: tpu_custom_call.1
$region0: #{tpu_custom_call.1}
  #allocation0 [shape = 'u32[]', space=smem, size = 0x4, offset = 0x4, fixed_abs, tag = 'smem constant byte address 0x4 - core index']
  #allocation1 [shape = 'u32[144,128]{1,0:T(1,128)}', space=vmem, size = 0x12000, scoped, tag = 'internal scratch']
  %s0 = inlined_call_operand.hbm [shape: bf16[8,8,128], index: 0, kind: input, shape index: {}]
  %s1 = inlined_call_operand.hbm [shape: f32[8,8], index: 1, kind: input, shape index: {}]
  %s2 = inlined_call_operand.hbm [shape: bf16[128,128], index: 2, kind: input, shape index: {}]
  %s3 = inlined_call_operand.vmem [shape: f32[1,128], index: 3, kind: input, shape index: {}]
  %s4 = inlined_call_operand.vmem [shape: f32[1,128], index: 4, kind: input, shape index: {}]
  %s5 = inlined_call_operand.hbm [shape: bf16[128,128], index: 5, kind: input, shape index: {}]
  %s6 = inlined_call_operand.vmem [shape: f32[1,128], index: 6, kind: input, shape index: {}]
  %s7 = inlined_call_operand.hbm [shape: bf16[128,128], index: 7, kind: input, shape index: {}]
  %s8 = inlined_call_operand.vmem [shape: f32[1,128], index: 8, kind: input, shape index: {}]
  %s9 = inlined_call_operand.hbm [shape: f32[8,128], index: 9, kind: output, shape index: {}]
  %s10 = sld [smem:[#allocation0]]
  $region66: #{tpu_custom_call.1} parent=0
    _
  %s12 = ssub.s32 1, %s10
  %s13 = scalar_select 0, %s12, %s10
  $region1: #{tpu_custom_call.1} parent=0
    #allocation2 [shape = 'u8[16384]{0}', space=vmem, size = 0x4000, scoped, tag = 'input window, operand 0, single buffered']
    #allocation3 [shape = 's32[1]{0}', space=sflag, size = 0x4, scoped, tag = 'scoped memory for tpu_custom_call.1']
    #allocation4 [shape = 's32[1]{0}', space=sflag, size = 0x4, scoped, tag = 'scoped memory for tpu_custom_call.1']
    #allocation5 [shape = 'u8[4096]{0}', space=vmem, size = 0x1000, scoped, tag = 'input window, operand 1, single buffered']
    #allocation6 [shape = 's32[1]{0}', space=sflag, size = 0x4, scoped, tag = 'scoped memory for tpu_custom_call.1']
    #allocation7 [shape = 'u8[32768]{0}', space=vmem, size = 0x8000, scoped, tag = 'input window, operand 2, single buffered']
    #allocation8 [shape = 'u8[32768]{0}', space=vmem, size = 0x8000, scoped, tag = 'input window, operand 5, single buffered']
    #allocation9 [shape = 's32[1]{0}', space=sflag, size = 0x4, scoped, tag = 'scoped memory for tpu_custom_call.1']
    #allocation10 [shape = 'u8[32768]{0}', space=vmem, size = 0x8000, scoped, tag = 'input window, operand 7, single buffered']
    #allocation11 [shape = 'u8[4096]{0}', space=vmem, size = 0x1000, scoped, tag = 'output window, operand 0, single buffered']
    %14 = vsyncpa [#allocation3], 0
    %15 = vsyncpa [#allocation6], 0
    %16 = vsyncpa [#allocation9], 0
    %17 = vsyncpa [#allocation4], 0
    // Predicated region
    $region2: #{tpu_custom_call.1} parent=1 // pred_check
      _
    $region3: #{tpu_custom_call.1} parent=1 // pred_check_branch
      %19 = sbr.rel (0) target = $region5
    $region4: #{tpu_custom_call.1} parent=1 // pred_region
      %s21 = ssub.s32 512, 512
      %22 = vsyncadd [#allocation3], %s21
      %s23 = sshll.u32 [#allocation2], 4
      %s24 = int_to_ptr.vmem [resolvable:$true] %s23
      %29 = dma.hbm_to_vmem [thread:$0]  %s0, 512, %s24, [#allocation3], 64, 64, 4
    $region5: #{tpu_custom_call.1} parent=1 // pred_fallthru
      _
    // Predicated region
    $region6: #{tpu_custom_call.1} parent=1 // pred_check
      _
    $region7: #{tpu_custom_call.1} parent=1 // pred_check_branch
      %31 = sbr.rel (0) target = $region9
    $region8: #{tpu_custom_call.1} parent=1 // pred_region
      %s33 = ssub.s32 128, 128
      %34 = vsyncadd [#allocation6], %s33
      %s36 = sshll.u32 [#allocation5], 4
      %s37 = int_to_ptr.vmem [resolvable:$true] %s36
      %39 = dma.hbm_to_vmem [thread:$0]  %s1, 128, %s37, [#allocation6]
    $region9: #{tpu_custom_call.1} parent=1 // pred_fallthru
      _
    // Predicated region
    $region10: #{tpu_custom_call.1} parent=1 // pred_check
      _
    $region11: #{tpu_custom_call.1} parent=1 // pred_check_branch
      %41 = sbr.rel (0) target = $region13
    $region12: #{tpu_custom_call.1} parent=1 // pred_region
      %s43 = ssub.s32 1024, 1024
      %44 = vsyncadd [#allocation6], %s43
      %s45 = sshll.u32 [#allocation7], 4
      %s46 = int_to_ptr.vmem [resolvable:$true] %s45
      %51 = dma.hbm_to_vmem [thread:$0]  %s2, 1024, %s46, [#allocation6], 64, 64, 4
    $region13: #{tpu_custom_call.1} parent=1 // pred_fallthru
      _
    // Predicated region
    $region14: #{tpu_custom_call.1} parent=1 // pred_check
      _
    $region15: #{tpu_custom_call.1} parent=1 // pred_check_branch
      %53 = sbr.rel (0) target = $region17
    $region16: #{tpu_custom_call.1} parent=1 // pred_region
      _
    $region17: #{tpu_custom_call.1} parent=1 // pred_fallthru
      _
    // Predicated region
    $region18: #{tpu_custom_call.1} parent=1 // pred_check
      _
    $region19: #{tpu_custom_call.1} parent=1 // pred_check_branch
      %55 = sbr.rel (0) target = $region21
    $region20: #{tpu_custom_call.1} parent=1 // pred_region
      _
    $region21: #{tpu_custom_call.1} parent=1 // pred_fallthru
      _
    // Predicated region
    $region22: #{tpu_custom_call.1} parent=1 // pred_check
      _
    $region23: #{tpu_custom_call.1} parent=1 // pred_check_branch
      %57 = sbr.rel (0) target = $region25
    $region24: #{tpu_custom_call.1} parent=1 // pred_region
      %s59 = ssub.s32 1024, 1024
      %60 = vsyncadd [#allocation9], %s59
      %s61 = sshll.u32 [#allocation8], 4
      %s62 = int_to_ptr.vmem [resolvable:$true] %s61
      %67 = dma.hbm_to_vmem [thread:$0]  %s5, 1024, %s62, [#allocation9], 64, 64, 4
    $region25: #{tpu_custom_call.1} parent=1 // pred_fallthru
      _
    // Predicated region
    $region26: #{tpu_custom_call.1} parent=1 // pred_check
      _
    $region27: #{tpu_custom_call.1} parent=1 // pred_check_branch
      %69 = sbr.rel (0) target = $region29
    $region28: #{tpu_custom_call.1} parent=1 // pred_region
      _
    $region29: #{tpu_custom_call.1} parent=1 // pred_fallthru
      _
    // Predicated region
    $region30: #{tpu_custom_call.1} parent=1 // pred_check
      _
    $region31: #{tpu_custom_call.1} parent=1 // pred_check_branch
      %71 = sbr.rel (0) target = $region33
    $region32: #{tpu_custom_call.1} parent=1 // pred_region
      %s73 = ssub.s32 1024, 1024
      %74 = vsyncadd [#allocation9], %s73
      %s75 = sshll.u32 [#allocation10], 4
      %s76 = int_to_ptr.vmem [resolvable:$true] %s75
      %81 = dma.hbm_to_vmem [thread:$0]  %s7, 1024, %s76, [#allocation9], 64, 64, 4
    $region33: #{tpu_custom_call.1} parent=1 // pred_fallthru
      _
    // Predicated region
    $region34: #{tpu_custom_call.1} parent=1 // pred_check
      _
    $region35: #{tpu_custom_call.1} parent=1 // pred_check_branch
      %83 = sbr.rel (0) target = $region37
    $region36: #{tpu_custom_call.1} parent=1 // pred_region
      _
    $region37: #{tpu_custom_call.1} parent=1 // pred_fallthru
      _
    // Predicated region
    $region38: #{tpu_custom_call.1} parent=1 // pred_check
      _
    $region39: #{tpu_custom_call.1} parent=1 // pred_check_branch
      %85 = sbr.rel (0) target = $region41
    $region40: #{tpu_custom_call.1} parent=1 // pred_region
      %86 = dma.done [#allocation3], 512
    $region41: #{tpu_custom_call.1} parent=1 // pred_fallthru
      _
    // Predicated region
    $region42: #{tpu_custom_call.1} parent=1 // pred_check
      _
    $region43: #{tpu_custom_call.1} parent=1 // pred_check_branch
      %88 = sbr.rel (0) target = $region45
    $region44: #{tpu_custom_call.1} parent=1 // pred_region
      %89 = dma.done [#allocation6], 128
    $region45: #{tpu_custom_call.1} parent=1 // pred_fallthru
      _
    // Predicated region
    $region46: #{tpu_custom_call.1} parent=1 // pred_check
      _
    $region47: #{tpu_custom_call.1} parent=1 // pred_check_branch
      %91 = sbr.rel (0) target = $region49
    $region48: #{tpu_custom_call.1} parent=1 // pred_region
      %92 = dma.done [#allocation6], 1024
    $region49: #{tpu_custom_call.1} parent=1 // pred_fallthru
      _
    // Predicated region
    $region50: #{tpu_custom_call.1} parent=1 // pred_check
      _
    $region51: #{tpu_custom_call.1} parent=1 // pred_check_branch
      %94 = sbr.rel (0) target = $region53
    $region52: #{tpu_custom_call.1} parent=1 // pred_region
      %95 = dma.done [#allocation9], 1024
    $region53: #{tpu_custom_call.1} parent=1 // pred_fallthru
      _
    // Predicated region
    $region54: #{tpu_custom_call.1} parent=1 // pred_check
      _
    $region55: #{tpu_custom_call.1} parent=1 // pred_check_branch
      %97 = sbr.rel (0) target = $region57
    $region56: #{tpu_custom_call.1} parent=1 // pred_region
      %98 = dma.done [#allocation9], 1024
    $region57: #{tpu_custom_call.1} parent=1 // pred_fallthru
      _
    %v100 = vld [vmem:[#allocation2] sm:$0xf]
    %v101 = vld [vmem:[#allocation2 + $0x4] sm:$0xf]
    %v102 = vld [vmem:[#allocation2 + $0x8] sm:$0xf]
    %v103 = vld [vmem:[#allocation2 + $0xc] sm:$0xf]
    %v104 = vld [vmem:[#allocation2 + $0x10] sm:$0xf]
    %v105 = vld [vmem:[#allocation2 + $0x14] sm:$0xf]
    %v106 = vld [vmem:[#allocation2 + $0x18] sm:$0xf]
    %v107 = vld [vmem:[#allocation2 + $0x1c] sm:$0xf]
    %v108 = vld [vmem:[#allocation7] sm:$0xf]
    %v109 = vld [vmem:[#allocation7 + $0x4] sm:$0xf]
    %v110 = vld [vmem:[#allocation7 + $0x8] sm:$0xf]
    %v111 = vld [vmem:[#allocation7 + $0xc] sm:$0xf]
    %v112 = vld [vmem:[#allocation7 + $0x10] sm:$0xf]
    %v113 = vld [vmem:[#allocation7 + $0x14] sm:$0xf]
    %v114 = vld [vmem:[#allocation7 + $0x18] sm:$0xf]
    %v115 = vld [vmem:[#allocation7 + $0x1c] sm:$0xf]
    %v116 = vld [vmem:[#allocation7 + $0x20] sm:$0xf]
    %v117 = vld [vmem:[#allocation7 + $0x24] sm:$0xf]
    %v118 = vld [vmem:[#allocation7 + $0x28] sm:$0xf]
    %v119 = vld [vmem:[#allocation7 + $0x2c] sm:$0xf]
    %v120 = vld [vmem:[#allocation7 + $0x30] sm:$0xf]
    %v121 = vld [vmem:[#allocation7 + $0x34] sm:$0xf]
    %v122 = vld [vmem:[#allocation7 + $0x38] sm:$0xf]
    %v123 = vld [vmem:[#allocation7 + $0x3c] sm:$0xf]
    %v124 = vld [vmem:[%s3] sm:$0x1]
    %v126 = vlaneseq
    %v127 = vshrl.u32 %v126, 7
    %v128 = vsub.s32 0, %v127
    %v129 = vrot.slane %v124, %v128
    %v139 = vunpack.c.l.b16 %v100
    %v140 = vunpack.c.l.b16 %v101
    %v141 = vunpack.c.l.b16 %v102
    %v142 = vunpack.c.l.b16 %v103
    %v143 = vunpack.c.l.b16 %v104
    %v144 = vunpack.c.l.b16 %v105
    %v145 = vunpack.c.l.b16 %v106
    %v146 = vunpack.c.l.b16 %v107
    %v147 = vpack.c.b16 %v140, %v139
    %v148 = vpack.c.b16 %v142, %v141
    %v149 = vpack.c.b16 %v144, %v143
    %v150 = vpack.c.b16 %v146, %v145
    %v171 = vunpack.c.l.b16 %v108
    %v172 = vunpack.c.l.b16 %v109
    %v173 = vunpack.c.l.b16 %v110
    %v174 = vunpack.c.l.b16 %v111
    %v175 = vunpack.c.l.b16 %v112
    %v176 = vunpack.c.l.b16 %v113
    %v177 = vunpack.c.l.b16 %v114
    %v178 = vunpack.c.l.b16 %v115
    %v179 = vunpack.c.l.b16 %v116
    %v180 = vunpack.c.l.b16 %v117
    %v181 = vunpack.c.l.b16 %v118
    %v182 = vunpack.c.l.b16 %v119
    %v183 = vunpack.c.l.b16 %v120
    %v184 = vunpack.c.l.b16 %v121
    %v185 = vunpack.c.l.b16 %v122
    %v186 = vunpack.c.l.b16 %v123
    %v187 = vpack.c.b16 %v172, %v171
    %v188 = vpack.c.b16 %v174, %v173
    %v189 = vpack.c.b16 %v176, %v175
    %v190 = vpack.c.b16 %v178, %v177
    %v191 = vpack.c.b16 %v180, %v179
    %v192 = vpack.c.b16 %v182, %v181
    %v193 = vpack.c.b16 %v184, %v183
    %v194 = vpack.c.b16 %v186, %v185
    %203 = vmatprep.subr.bf16.mxu0 0
    %204 = vmatpush1.bf16.msra.mxu0 %v194
    %205 = vmatprep.subr.bf16.mxu0 0
    %206 = vmatpush1.bf16.msra.mxu0 %v193
    %207 = vmatprep.subr.bf16.mxu0 0
    %208 = vmatpush1.bf16.msra.mxu0 %v192
    %209 = vmatprep.subr.bf16.mxu0 0
    %210 = vmatpush1.bf16.msra.mxu0 %v191
    %211 = vmatprep.subr.bf16.mxu0 0
    %212 = vmatpush1.bf16.msra.mxu0 %v190
    %213 = vmatprep.subr.bf16.mxu0 0
    %214 = vmatpush1.bf16.msra.mxu0 %v189
    %215 = vmatprep.subr.bf16.mxu0 0
    %216 = vmatpush1.bf16.msra.mxu0 %v188
    %217 = vmatprep.subr.bf16.mxu0 0
    %218 = vmatpush1.bf16.msra.mxu0 %v187
    %219 = vmatprep.subr.bf16.mxu0 0
    %220 = vmatpush2.bf16.msra.mxu0 0
    %221 = vmatprep.subr.bf16.mxu0 0
    %222 = vmatpush2.bf16.msra.mxu0 0
    %223 = vmatprep.subr.bf16.mxu0 0
    %224 = vmatpush2.bf16.msra.mxu0 0
    %225 = vmatprep.subr.bf16.mxu0 0
    %226 = vmatpush2.bf16.msra.mxu0 0
    %227 = vmatprep.subr.bf16.mxu0 0
    %228 = vmatpush2.bf16.msra.mxu0 0
    %229 = vmatprep.subr.bf16.mxu0 0
    %230 = vmatpush2.bf16.msra.mxu0 0
    %231 = vmatprep.subr.bf16.mxu0 0
    %232 = vmatpush2.bf16.msra.mxu0 0
    %233 = vmatprep.subr.bf16.mxu0 0
    %234 = vmatpush2.bf16.msra.mxu0 0
    %235 = vmatprep.mubr.bf16.mxu0 0
    %236 = vmatmul.mubr.bf16.gmra.mxu0 %v147
    %v237 = vpop.f32.mrf.mxu0
    %v238 = vadd.f32 %v129, %v237
    %v239 = vpop.f32.mrf.mxu0
    %v240 = vpop.f32.mrf.mxu0
    %v241 = vadd.f32 %v129, %v240
    %v242 = vpop.f32.mrf.mxu0
    %243 = vmatprep.mubr.bf16.mxu0 0
    %244 = vmatmul.mubr.bf16.gmra.mxu0 %v148
    %v245 = vpop.f32.mrf.mxu0
    %v246 = vadd.f32 %v129, %v245
    %v247 = vpop.f32.mrf.mxu0
    %v248 = vpop.f32.mrf.mxu0
    %v249 = vadd.f32 %v129, %v248
    %v250 = vpop.f32.mrf.mxu0
    %251 = vmatprep.mubr.bf16.mxu0 0
    %252 = vmatmul.mubr.bf16.gmra.mxu0 %v149
    %v253 = vpop.f32.mrf.mxu0
    %v254 = vadd.f32 %v129, %v253
    %v255 = vpop.f32.mrf.mxu0
    %v256 = vpop.f32.mrf.mxu0
    %v257 = vadd.f32 %v129, %v256
    %v258 = vpop.f32.mrf.mxu0
    %259 = vmatprep.mubr.bf16.mxu0 0
    %260 = vmatmul.mubr.bf16.gmra.mxu0 %v150
    %v261 = vpop.f32.mrf.mxu0
    %v262 = vadd.f32 %v129, %v261
    %v263 = vpop.f32.mrf.mxu0
    %v264 = vpop.f32.mrf.mxu0
    %v265 = vadd.f32 %v129, %v264
    %v266 = vpop.f32.mrf.mxu0
    %267 = vdwg.mxu0
    %v268 = vpack.c.bf16 %v241, %v238
    %v269 = vpack.c.bf16 %v249, %v246
    %v270 = vpack.c.bf16 %v257, %v254
    %v271 = vpack.c.bf16 %v265, %v262
    %v272 = vtanh.bf16.pop %v268
    %v273 = vtanh.bf16.pop %v269
    %v274 = vtanh.bf16.pop %v270
    %v275 = vtanh.bf16.pop %v271
    %v280 = vunpack.c.l.b16 %v272
    %v281 = vunpack.c.h.b16 %v272
    %v282 = vunpack.c.l.b16 %v273
    %v283 = vunpack.c.h.b16 %v273
    %v284 = vunpack.c.l.b16 %v274
    %v285 = vunpack.c.h.b16 %v274
    %v286 = vunpack.c.l.b16 %v275
    %v287 = vunpack.c.h.b16 %v275
    %v288 = vpack.c.b16 %v280, %v280
    %v289 = vpack.c.b16 %v281, %v281
    %v290 = vpack.c.b16 %v282, %v282
    %v291 = vpack.c.b16 %v283, %v283
    %v292 = vpack.c.b16 %v284, %v284
    %v293 = vpack.c.b16 %v285, %v285
    %v294 = vpack.c.b16 %v286, %v286
    %v295 = vpack.c.b16 %v287, %v287
    %v304 = vunpack.c.l.bf16 %v288
    %v305 = vunpack.c.l.bf16 %v289
    %v306 = vunpack.c.l.bf16 %v290
    %v307 = vunpack.c.l.bf16 %v291
    %v308 = vunpack.c.l.bf16 %v292
    %v309 = vunpack.c.l.bf16 %v293
    %v310 = vunpack.c.l.bf16 %v294
    %v311 = vunpack.c.l.bf16 %v295
    %v312 = vld [vmem:[%s4] sm:$0x1]
    %v314 = vlaneseq
    %v315 = vshrl.u32 %v314, 7
    %v316 = vsub.s32 0, %v315
    %v317 = vrot.slane %v312, %v316
    %v319 = vmul.f32 %v304, %v317
    %v320 = vmul.f32 %v305, %v317
    %v321 = vmul.f32 %v306, %v317
    %v322 = vmul.f32 %v307, %v317
    %v323 = vmul.f32 %v308, %v317
    %v324 = vmul.f32 %v309, %v317
    %v325 = vmul.f32 %v310, %v317
    %v326 = vmul.f32 %v311, %v317
    %327 = vadd.xlane.f32.xlu0 %v319
    %v328 = vpop.xlane.xlu0 %327
    %329 = vadd.xlane.f32.xlu0 %v320
    %v330 = vpop.xlane.xlu0 %329
    %331 = vadd.xlane.f32.xlu0 %v321
    %v332 = vpop.xlane.xlu0 %331
    %333 = vadd.xlane.f32.xlu0 %v322
    %v334 = vpop.xlane.xlu0 %333
    %335 = vadd.xlane.f32.xlu0 %v323
    %v336 = vpop.xlane.xlu0 %335
    %337 = vadd.xlane.f32.xlu0 %v324
    %v338 = vpop.xlane.xlu0 %337
    %339 = vadd.xlane.f32.xlu0 %v325
    %v340 = vpop.xlane.xlu0 %339
    %341 = vadd.xlane.f32.xlu0 %v326
    %v342 = vpop.xlane.xlu0 %341
    %v343 = vld [vmem:[#allocation5] sm:$0xff]
    %v344 = vsub.f32 1.0, %v343
    %v345 = vmul.f32 %v344, -1e+20
    %v347 = vlaneseq
    %v348 = vshrl.u32 %v347, 7
    %v349 = vsub.s32 0, %v348
    %v350 = vrot.slane %v345, %v349
    %352 = vbcast.lane.b32.xlu0 %v350, 256
    %v353 = vpop.permute.xlu0 %352
    %v354 = vlaneseq
    %v355 = vshrl.u32 %v354, 7
    %v356 = vsub.s32 1, %v355
    %v357 = vrot.slane %v345, %v356
    %359 = vbcast.lane.b32.xlu0 %v357, 256
    %v360 = vpop.permute.xlu0 %359
    %v361 = vlaneseq
    %v362 = vshrl.u32 %v361, 7
    %v363 = vsub.s32 2, %v362
    %v364 = vrot.slane %v345, %v363
    %366 = vbcast.lane.b32.xlu0 %v364, 256
    %v367 = vpop.permute.xlu0 %366
    %v368 = vlaneseq
    %v369 = vshrl.u32 %v368, 7
    %v370 = vsub.s32 3, %v369
    %v371 = vrot.slane %v345, %v370
    %373 = vbcast.lane.b32.xlu0 %v371, 256
    %v374 = vpop.permute.xlu0 %373
    %v375 = vlaneseq
    %v376 = vshrl.u32 %v375, 7
    %v377 = vsub.s32 4, %v376
    %v378 = vrot.slane %v345, %v377
    %380 = vbcast.lane.b32.xlu0 %v378, 256
    %v381 = vpop.permute.xlu0 %380
    %v382 = vlaneseq
    %v383 = vshrl.u32 %v382, 7
    %v384 = vsub.s32 5, %v383
    %v385 = vrot.slane %v345, %v384
    %387 = vbcast.lane.b32.xlu0 %v385, 256
    %v388 = vpop.permute.xlu0 %387
    %v389 = vlaneseq
    %v390 = vshrl.u32 %v389, 7
    %v391 = vsub.s32 6, %v390
    %v392 = vrot.slane %v345, %v391
    %394 = vbcast.lane.b32.xlu0 %v392, 256
    %v395 = vpop.permute.xlu0 %394
    %v396 = vlaneseq
    %v397 = vshrl.u32 %v396, 7
    %v398 = vsub.s32 7, %v397
    %v399 = vrot.slane %v345, %v398
    %401 = vbcast.lane.b32.xlu0 %v399, 256
    %v402 = vpop.permute.xlu0 %401
    %v411 = vadd.f32 %v328, %v353
    %v412 = vadd.f32 %v330, %v360
    %v413 = vadd.f32 %v332, %v367
    %v414 = vadd.f32 %v334, %v374
    %v415 = vadd.f32 %v336, %v381
    %v416 = vadd.f32 %v338, %v388
    %v417 = vadd.f32 %v340, %v395
    %v418 = vadd.f32 %v342, %v402
    %427 = vset.pattern.permute.xlu0 0
    %428 = vperm.xlu0 %427, %v411
    %v429 = vpop.permute.xlu0 %428
    %430 = vset.pattern.permute.xlu0 0
    %431 = vperm.xlu0 %430, %v412
    %v432 = vpop.permute.xlu0 %431
    %433 = vset.pattern.permute.xlu0 0
    %434 = vperm.xlu0 %433, %v413
    %v435 = vpop.permute.xlu0 %434
    %436 = vset.pattern.permute.xlu0 0
    %437 = vperm.xlu0 %436, %v414
    %v438 = vpop.permute.xlu0 %437
    %439 = vset.pattern.permute.xlu0 0
    %440 = vperm.xlu0 %439, %v415
    %v441 = vpop.permute.xlu0 %440
    %442 = vset.pattern.permute.xlu0 0
    %443 = vperm.xlu0 %442, %v416
    %v444 = vpop.permute.xlu0 %443
    %445 = vset.pattern.permute.xlu0 0
    %446 = vperm.xlu0 %445, %v417
    %v447 = vpop.permute.xlu0 %446
    %448 = vset.pattern.permute.xlu0 0
    %449 = vperm.xlu0 %448, %v418
    %v450 = vpop.permute.xlu0 %449
    %v451 = vlaneseq
    %v452 = vand.u32 %v451, 127
    %v453 = vlaneseq
    %v454 = vshrl.u32 %v453, 7
    %v455 = vsub.s32 %v452, %v454
    %v456 = vrot.slane %v429, %v455
    %v457 = vlaneseq
    %v458 = vshrl.u32 %v457, 7
    %v459 = vsub.s32 %v452, %v458
    %v460 = vrot.slane %v432, %v459
    %v461 = vlaneseq
    %v462 = vshrl.u32 %v461, 7
    %v463 = vsub.s32 %v452, %v462
    %v464 = vrot.slane %v435, %v463
    %v465 = vlaneseq
    %v466 = vshrl.u32 %v465, 7
    %v467 = vsub.s32 %v452, %v466
    %v468 = vrot.slane %v438, %v467
    %v469 = vlaneseq
    %v470 = vshrl.u32 %v469, 7
    %v471 = vsub.s32 %v452, %v470
    %v472 = vrot.slane %v441, %v471
    %v473 = vlaneseq
    %v474 = vshrl.u32 %v473, 7
    %v475 = vsub.s32 %v452, %v474
    %v476 = vrot.slane %v444, %v475
    %v477 = vlaneseq
    %v478 = vshrl.u32 %v477, 7
    %v479 = vsub.s32 %v452, %v478
    %v480 = vrot.slane %v447, %v479
    %v481 = vlaneseq
    %v482 = vshrl.u32 %v481, 7
    %v483 = vsub.s32 %v452, %v482
    %v484 = vrot.slane %v450, %v483
    %vm485 = vcmask 1041409
    %v486 = vsel %vm485, %v460, %v456
    %vm487 = vcmask 1042434
    %v488 = vsel %vm487, %v464, %v486
    %vm489 = vcmask 1043459
    %v490 = vsel %vm489, %v468, %v488
    %vm491 = vcmask 1044484
    %v492 = vsel %vm491, %v472, %v490
    %vm493 = vcmask 1045509
    %v494 = vsel %vm493, %v476, %v492
    %vm495 = vcmask 1046534
    %v496 = vsel %vm495, %v480, %v494
    %vm497 = vcmask 1047559
    %v498 = vsel %vm497, %v484, %v496
    %vm500 = vcmask 64512
    %v501 = vsel %vm500, %v498, -inf
    %502 = vmax.xlane.f32.xlu0 %v501
    %v503 = vpop.xlane.xlu0 %502
    %v505 = vlaneseq
    %v506 = vshrl.u32 %v505, 7
    %v507 = vsub.s32 0, %v506
    %v508 = vrot.slane %v503, %v507
    %v509 = vlaneseq
    %v510 = vshrl.u32 %v509, 7
    %v511 = vsub.s32 1, %v510
    %v512 = vrot.slane %v503, %v511
    %v513 = vlaneseq
    %v514 = vshrl.u32 %v513, 7
    %v515 = vsub.s32 2, %v514
    %v516 = vrot.slane %v503, %v515
    %v517 = vlaneseq
    %v518 = vshrl.u32 %v517, 7
    %v519 = vsub.s32 3, %v518
    %v520 = vrot.slane %v503, %v519
    %v521 = vlaneseq
    %v522 = vshrl.u32 %v521, 7
    %v523 = vsub.s32 4, %v522
    %v524 = vrot.slane %v503, %v523
    %v525 = vlaneseq
    %v526 = vshrl.u32 %v525, 7
    %v527 = vsub.s32 5, %v526
    %v528 = vrot.slane %v503, %v527
    %v529 = vlaneseq
    %v530 = vshrl.u32 %v529, 7
    %v531 = vsub.s32 6, %v530
    %v532 = vrot.slane %v503, %v531
    %v533 = vlaneseq
    %v534 = vshrl.u32 %v533, 7
    %v535 = vsub.s32 7, %v534
    %v536 = vrot.slane %v503, %v535
    %v545 = vsub.f32 %v411, %v508
    %v546 = vsub.f32 %v412, %v512
    %v547 = vsub.f32 %v413, %v516
    %v548 = vsub.f32 %v414, %v520
    %v549 = vsub.f32 %v415, %v524
    %v550 = vsub.f32 %v416, %v528
    %v551 = vsub.f32 %v417, %v532
    %v552 = vsub.f32 %v418, %v536
    %v553 = vmul.f32 %v545, 1.442695
    %v554 = vpow.pop %v553
    %v555 = vmul.f32 %v546, 1.442695
    %v556 = vpow.pop %v555
    %v557 = vmul.f32 %v547, 1.442695
    %v558 = vpow.pop %v557
    %v559 = vmul.f32 %v548, 1.442695
    %v560 = vpow.pop %v559
    %v561 = vmul.f32 %v549, 1.442695
    %v562 = vpow.pop %v561
    %v563 = vmul.f32 %v550, 1.442695
    %v564 = vpow.pop %v563
    %v565 = vmul.f32 %v551, 1.442695
    %v566 = vpow.pop %v565
    %v567 = vmul.f32 %v552, 1.442695
    %v568 = vpow.pop %v567
    %577 = vset.pattern.permute.xlu0 0
    %578 = vperm.xlu0 %577, %v554
    %v579 = vpop.permute.xlu0 %578
    %580 = vset.pattern.permute.xlu0 0
    %581 = vperm.xlu0 %580, %v556
    %v582 = vpop.permute.xlu0 %581
    %583 = vset.pattern.permute.xlu0 0
    %584 = vperm.xlu0 %583, %v558
    %v585 = vpop.permute.xlu0 %584
    %586 = vset.pattern.permute.xlu0 0
    %587 = vperm.xlu0 %586, %v560
    %v588 = vpop.permute.xlu0 %587
    %589 = vset.pattern.permute.xlu0 0
    %590 = vperm.xlu0 %589, %v562
    %v591 = vpop.permute.xlu0 %590
    %592 = vset.pattern.permute.xlu0 0
    %593 = vperm.xlu0 %592, %v564
    %v594 = vpop.permute.xlu0 %593
    %595 = vset.pattern.permute.xlu0 0
    %596 = vperm.xlu0 %595, %v566
    %v597 = vpop.permute.xlu0 %596
    %598 = vset.pattern.permute.xlu0 0
    %599 = vperm.xlu0 %598, %v568
    %v600 = vpop.permute.xlu0 %599
    %v601 = vlaneseq
    %v602 = vshrl.u32 %v601, 7
    %v603 = vsub.s32 %v452, %v602
    %v604 = vrot.slane %v579, %v603
    %v605 = vlaneseq
    %v606 = vshrl.u32 %v605, 7
    %v607 = vsub.s32 %v452, %v606
    %v608 = vrot.slane %v582, %v607
    %v609 = vlaneseq
    %v610 = vshrl.u32 %v609, 7
    %v611 = vsub.s32 %v452, %v610
    %v612 = vrot.slane %v585, %v611
    %v613 = vlaneseq
    %v614 = vshrl.u32 %v613, 7
    %v615 = vsub.s32 %v452, %v614
    %v616 = vrot.slane %v588, %v615
    %v617 = vlaneseq
    %v618 = vshrl.u32 %v617, 7
    %v619 = vsub.s32 %v452, %v618
    %v620 = vrot.slane %v591, %v619
    %v621 = vlaneseq
    %v622 = vshrl.u32 %v621, 7
    %v623 = vsub.s32 %v452, %v622
    %v624 = vrot.slane %v594, %v623
    %v625 = vlaneseq
    %v626 = vshrl.u32 %v625, 7
    %v627 = vsub.s32 %v452, %v626
    %v628 = vrot.slane %v597, %v627
    %v629 = vlaneseq
    %v630 = vshrl.u32 %v629, 7
    %v631 = vsub.s32 %v452, %v630
    %v632 = vrot.slane %v600, %v631
    %v633 = vsel %vm485, %v608, %v604
    %v634 = vsel %vm487, %v612, %v633
    %v635 = vsel %vm489, %v616, %v634
    %v636 = vsel %vm491, %v620, %v635
    %v637 = vsel %vm493, %v624, %v636
    %v638 = vsel %vm495, %v628, %v637
    %v639 = vsel %vm497, %v632, %v638
    %v641 = vsel %vm500, %v639, 0.0
    %642 = vadd.xlane.f32.xlu0 %v641
    %v643 = vpop.xlane.xlu0 %642
    %v644 = vrcp.pop %v643
    %v646 = vlaneseq
    %v647 = vshrl.u32 %v646, 7
    %v648 = vsub.s32 0, %v647
    %v649 = vrot.slane %v644, %v648
    %v650 = vlaneseq
    %v651 = vshrl.u32 %v650, 7
    %v652 = vsub.s32 1, %v651
    %v653 = vrot.slane %v644, %v652
    %v654 = vlaneseq
    %v655 = vshrl.u32 %v654, 7
    %v656 = vsub.s32 2, %v655
    %v657 = vrot.slane %v644, %v656
    %v658 = vlaneseq
    %v659 = vshrl.u32 %v658, 7
    %v660 = vsub.s32 3, %v659
    %v661 = vrot.slane %v644, %v660
    %v662 = vlaneseq
    %v663 = vshrl.u32 %v662, 7
    %v664 = vsub.s32 4, %v663
    %v665 = vrot.slane %v644, %v664
    %v666 = vlaneseq
    %v667 = vshrl.u32 %v666, 7
    %v668 = vsub.s32 5, %v667
    %v669 = vrot.slane %v644, %v668
    %v670 = vlaneseq
    %v671 = vshrl.u32 %v670, 7
    %v672 = vsub.s32 6, %v671
    %v673 = vrot.slane %v644, %v672
    %v674 = vlaneseq
    %v675 = vshrl.u32 %v674, 7
    %v676 = vsub.s32 7, %v675
    %v677 = vrot.slane %v644, %v676
    %v686 = vmul.f32 %v554, %v649
    %v687 = vmul.f32 %v556, %v653
    %v688 = vmul.f32 %v558, %v657
    %v689 = vmul.f32 %v560, %v661
    %v690 = vmul.f32 %v562, %v665
    %v691 = vmul.f32 %v564, %v669
    %v692 = vmul.f32 %v566, %v673
    %v693 = vmul.f32 %v568, %v677
    %v694 = vunpack.c.l.bf16 %v100
    %v695 = vunpack.c.l.bf16 %v101
    %v696 = vunpack.c.l.bf16 %v102
    %v697 = vunpack.c.l.bf16 %v103
    %v698 = vunpack.c.l.bf16 %v104
    %v699 = vunpack.c.l.bf16 %v105
    %v700 = vunpack.c.l.bf16 %v106
    %v701 = vunpack.c.l.bf16 %v107
    %703 = vset.pattern.permute.xlu0 0
    %704 = vperm.xlu0 %703, %v686
    %v705 = vpop.permute.xlu0 %704
    %708 = vset.pattern.permute.xlu0 0
    %709 = vperm.xlu0 %708, %v687
    %v710 = vpop.permute.xlu0 %709
    %713 = vset.pattern.permute.xlu0 0
    %714 = vperm.xlu0 %713, %v688
    %v715 = vpop.permute.xlu0 %714
    %718 = vset.pattern.permute.xlu0 0
    %719 = vperm.xlu0 %718, %v689
    %v720 = vpop.permute.xlu0 %719
    %723 = vset.pattern.permute.xlu0 0
    %724 = vperm.xlu0 %723, %v690
    %v725 = vpop.permute.xlu0 %724
    %728 = vset.pattern.permute.xlu0 0
    %729 = vperm.xlu0 %728, %v691
    %v730 = vpop.permute.xlu0 %729
    %733 = vset.pattern.permute.xlu0 0
    %734 = vperm.xlu0 %733, %v692
    %v735 = vpop.permute.xlu0 %734
    %738 = vset.pattern.permute.xlu0 0
    %739 = vperm.xlu0 %738, %v693
    %v740 = vpop.permute.xlu0 %739
    %v742 = vmul.f32 %v705, %v694
    %v743 = vmul.f32 %v710, %v695
    %v744 = vmul.f32 %v715, %v696
    %v745 = vmul.f32 %v720, %v697
    %v746 = vmul.f32 %v725, %v698
    %v747 = vmul.f32 %v730, %v699
    %v748 = vmul.f32 %v735, %v700
    %v749 = vmul.f32 %v740, %v701
    %v750 = vrot.slane %v742, 4
    %v751 = vadd.f32 %v742, %v750
    %v752 = vrot.slane %v751, 2
    %v753 = vadd.f32 %v751, %v752
    %v754 = vrot.slane %v753, 1
    %v755 = vadd.f32 %v753, %v754
    %v756 = vrot.slane %v743, 4
    %v757 = vadd.f32 %v743, %v756
    %v758 = vrot.slane %v757, 2
    %v759 = vadd.f32 %v757, %v758
    %v760 = vrot.slane %v759, 1
    %v761 = vadd.f32 %v759, %v760
    %v762 = vrot.slane %v744, 4
    %v763 = vadd.f32 %v744, %v762
    %v764 = vrot.slane %v763, 2
    %v765 = vadd.f32 %v763, %v764
    %v766 = vrot.slane %v765, 1
    %v767 = vadd.f32 %v765, %v766
    %v768 = vrot.slane %v745, 4
    %v769 = vadd.f32 %v745, %v768
    %v770 = vrot.slane %v769, 2
    %v771 = vadd.f32 %v769, %v770
    %v772 = vrot.slane %v771, 1
    %v773 = vadd.f32 %v771, %v772
    %v774 = vrot.slane %v746, 4
    %v775 = vadd.f32 %v746, %v774
    %v776 = vrot.slane %v775, 2
    %v777 = vadd.f32 %v775, %v776
    %v778 = vrot.slane %v777, 1
    %v779 = vadd.f32 %v777, %v778
    %v780 = vrot.slane %v747, 4
    %v781 = vadd.f32 %v747, %v780
    %v782 = vrot.slane %v781, 2
    %v783 = vadd.f32 %v781, %v782
    %v784 = vrot.slane %v783, 1
    %v785 = vadd.f32 %v783, %v784
    %v786 = vrot.slane %v748, 4
    %v787 = vadd.f32 %v748, %v786
    %v788 = vrot.slane %v787, 2
    %v789 = vadd.f32 %v787, %v788
    %v790 = vrot.slane %v789, 1
    %v791 = vadd.f32 %v789, %v790
    %v792 = vrot.slane %v749, 4
    %v793 = vadd.f32 %v749, %v792
    %v794 = vrot.slane %v793, 2
    %v795 = vadd.f32 %v793, %v794
    %v796 = vrot.slane %v795, 1
    %v797 = vadd.f32 %v795, %v796
    %v798 = vpack.c.bf16 %v755, %v755
    %v799 = vpack.c.bf16 %v761, %v761
    %v800 = vpack.c.bf16 %v767, %v767
    %v801 = vpack.c.bf16 %v773, %v773
    %v802 = vpack.c.bf16 %v779, %v779
    %v803 = vpack.c.bf16 %v785, %v785
    %v804 = vpack.c.bf16 %v791, %v791
    %v805 = vpack.c.bf16 %v797, %v797
    %v806 = vld [vmem:[#allocation8] sm:$0xf]
    %v807 = vld [vmem:[#allocation8 + $0x4] sm:$0xf]
    %v808 = vld [vmem:[#allocation8 + $0x8] sm:$0xf]
    %v809 = vld [vmem:[#allocation8 + $0xc] sm:$0xf]
    %v810 = vld [vmem:[#allocation8 + $0x10] sm:$0xf]
    %v811 = vld [vmem:[#allocation8 + $0x14] sm:$0xf]
    %v812 = vld [vmem:[#allocation8 + $0x18] sm:$0xf]
    %v813 = vld [vmem:[#allocation8 + $0x1c] sm:$0xf]
    %v814 = vld [vmem:[#allocation8 + $0x20] sm:$0xf]
    %v815 = vld [vmem:[#allocation8 + $0x24] sm:$0xf]
    %v816 = vld [vmem:[#allocation8 + $0x28] sm:$0xf]
    %v817 = vld [vmem:[#allocation8 + $0x2c] sm:$0xf]
    %v818 = vld [vmem:[#allocation8 + $0x30] sm:$0xf]
    %v819 = vld [vmem:[#allocation8 + $0x34] sm:$0xf]
    %v820 = vld [vmem:[#allocation8 + $0x38] sm:$0xf]
    %v821 = vld [vmem:[#allocation8 + $0x3c] sm:$0xf]
    %v822 = vld [vmem:[%s6] sm:$0x1]
    %v824 = vlaneseq
    %v825 = vshrl.u32 %v824, 7
    %v826 = vsub.s32 0, %v825
    %v827 = vrot.slane %v822, %v826
    %v837 = vunpack.c.l.b16 %v798
    %v838 = vunpack.c.l.b16 %v799
    %v839 = vunpack.c.l.b16 %v800
    %v840 = vunpack.c.l.b16 %v801
    %v841 = vunpack.c.l.b16 %v802
    %v842 = vunpack.c.l.b16 %v803
    %v843 = vunpack.c.l.b16 %v804
    %v844 = vunpack.c.l.b16 %v805
    %v845 = vsel %vm485, %v838, %v837
    %v846 = vsel %vm487, %v839, %v845
    %v847 = vsel %vm489, %v840, %v846
    %v848 = vsel %vm491, %v841, %v847
    %v849 = vsel %vm493, %v842, %v848
    %v850 = vsel %vm495, %v843, %v849
    %v851 = vsel %vm497, %v844, %v850
    %v852 = vpack.c.b16 %v851, %v851
    %v870 = vunpack.c.l.b16 %v806
    %v871 = vunpack.c.l.b16 %v807
    %v872 = vunpack.c.l.b16 %v808
    %v873 = vunpack.c.l.b16 %v809
    %v874 = vunpack.c.l.b16 %v810
    %v875 = vunpack.c.l.b16 %v811
    %v876 = vunpack.c.l.b16 %v812
    %v877 = vunpack.c.l.b16 %v813
    %v878 = vunpack.c.l.b16 %v814
    %v879 = vunpack.c.l.b16 %v815
    %v880 = vunpack.c.l.b16 %v816
    %v881 = vunpack.c.l.b16 %v817
    %v882 = vunpack.c.l.b16 %v818
    %v883 = vunpack.c.l.b16 %v819
    %v884 = vunpack.c.l.b16 %v820
    %v885 = vunpack.c.l.b16 %v821
    %v886 = vpack.c.b16 %v871, %v870
    %v887 = vpack.c.b16 %v873, %v872
    %v888 = vpack.c.b16 %v875, %v874
    %v889 = vpack.c.b16 %v877, %v876
    %v890 = vpack.c.b16 %v879, %v878
    %v891 = vpack.c.b16 %v881, %v880
    %v892 = vpack.c.b16 %v883, %v882
    %v893 = vpack.c.b16 %v885, %v884
    %902 = vmatprep.subr.bf16.mxu0 0
    %903 = vmatpush1.bf16.msra.mxu0 %v893
    %904 = vmatprep.subr.bf16.mxu0 0
    %905 = vmatpush1.bf16.msra.mxu0 %v892
    %906 = vmatprep.subr.bf16.mxu0 0
    %907 = vmatpush1.bf16.msra.mxu0 %v891
    %908 = vmatprep.subr.bf16.mxu0 0
    %909 = vmatpush1.bf16.msra.mxu0 %v890
    %910 = vmatprep.subr.bf16.mxu0 0
    %911 = vmatpush1.bf16.msra.mxu0 %v889
    %912 = vmatprep.subr.bf16.mxu0 0
    %913 = vmatpush1.bf16.msra.mxu0 %v888
    %914 = vmatprep.subr.bf16.mxu0 0
    %915 = vmatpush1.bf16.msra.mxu0 %v887
    %916 = vmatprep.subr.bf16.mxu0 0
    %917 = vmatpush1.bf16.msra.mxu0 %v886
    %918 = vmatprep.subr.bf16.mxu0 0
    %919 = vmatpush2.bf16.msra.mxu0 0
    %920 = vmatprep.subr.bf16.mxu0 0
    %921 = vmatpush2.bf16.msra.mxu0 0
    %922 = vmatprep.subr.bf16.mxu0 0
    %923 = vmatpush2.bf16.msra.mxu0 0
    %924 = vmatprep.subr.bf16.mxu0 0
    %925 = vmatpush2.bf16.msra.mxu0 0
    %926 = vmatprep.subr.bf16.mxu0 0
    %927 = vmatpush2.bf16.msra.mxu0 0
    %928 = vmatprep.subr.bf16.mxu0 0
    %929 = vmatpush2.bf16.msra.mxu0 0
    %930 = vmatprep.subr.bf16.mxu0 0
    %931 = vmatpush2.bf16.msra.mxu0 0
    %932 = vmatprep.subr.bf16.mxu0 0
    %933 = vmatpush2.bf16.msra.mxu0 0
    %934 = vmatprep.mubr.bf16.mxu0 0
    %935 = vmatmul.mubr.bf16.gmra.mxu0 %v852
    %v936 = vpop.f32.mrf.mxu0
    %v937 = vadd.f32 %v827, %v936
    %v938 = vpop.f32.mrf.mxu0
    %v939 = vpop.f32.mrf.mxu0
    %v940 = vpop.f32.mrf.mxu0
    %941 = vdwg.mxu0
    %v942 = vtanh.pop %v937
    %v943 = vpack.c.bf16 %v942, %v942
    %v944 = vld [vmem:[#allocation10] sm:$0xf]
    %v945 = vld [vmem:[#allocation10 + $0x4] sm:$0xf]
    %v946 = vld [vmem:[#allocation10 + $0x8] sm:$0xf]
    %v947 = vld [vmem:[#allocation10 + $0xc] sm:$0xf]
    %v948 = vld [vmem:[#allocation10 + $0x10] sm:$0xf]
    %v949 = vld [vmem:[#allocation10 + $0x14] sm:$0xf]
    %v950 = vld [vmem:[#allocation10 + $0x18] sm:$0xf]
    %v951 = vld [vmem:[#allocation10 + $0x1c] sm:$0xf]
    %v952 = vld [vmem:[#allocation10 + $0x20] sm:$0xf]
    %v953 = vld [vmem:[#allocation10 + $0x24] sm:$0xf]
    %v954 = vld [vmem:[#allocation10 + $0x28] sm:$0xf]
    %v955 = vld [vmem:[#allocation10 + $0x2c] sm:$0xf]
    %v956 = vld [vmem:[#allocation10 + $0x30] sm:$0xf]
    %v957 = vld [vmem:[#allocation10 + $0x34] sm:$0xf]
    %v958 = vld [vmem:[#allocation10 + $0x38] sm:$0xf]
    %v959 = vld [vmem:[#allocation10 + $0x3c] sm:$0xf]
    %v960 = vld [vmem:[%s8] sm:$0x1]
    %v962 = vlaneseq
    %v963 = vshrl.u32 %v962, 7
    %v964 = vsub.s32 0, %v963
    %v965 = vrot.slane %v960, %v964
    %v983 = vunpack.c.l.b16 %v944
    %v984 = vunpack.c.l.b16 %v945
    %v985 = vunpack.c.l.b16 %v946
    %v986 = vunpack.c.l.b16 %v947
    %v987 = vunpack.c.l.b16 %v948
    %v988 = vunpack.c.l.b16 %v949
    %v989 = vunpack.c.l.b16 %v950
    %v990 = vunpack.c.l.b16 %v951
    %v991 = vunpack.c.l.b16 %v952
    %v992 = vunpack.c.l.b16 %v953
    %v993 = vunpack.c.l.b16 %v954
    %v994 = vunpack.c.l.b16 %v955
    %v995 = vunpack.c.l.b16 %v956
    %v996 = vunpack.c.l.b16 %v957
    %v997 = vunpack.c.l.b16 %v958
    %v998 = vunpack.c.l.b16 %v959
    %v999 = vpack.c.b16 %v984, %v983
    %v1000 = vpack.c.b16 %v986, %v985
    %v1001 = vpack.c.b16 %v988, %v987
    %v1002 = vpack.c.b16 %v990, %v989
    %v1003 = vpack.c.b16 %v992, %v991
    %v1004 = vpack.c.b16 %v994, %v993
    %v1005 = vpack.c.b16 %v996, %v995
    %v1006 = vpack.c.b16 %v998, %v997
    %1015 = vmatprep.subr.bf16.mxu0 0
    %1016 = vmatpush1.bf16.msra.mxu0 %v1006
    %1017 = vmatprep.subr.bf16.mxu0 0
    %1018 = vmatpush1.bf16.msra.mxu0 %v1005
    %1019 = vmatprep.subr.bf16.mxu0 0
    %1020 = vmatpush1.bf16.msra.mxu0 %v1004
    %1021 = vmatprep.subr.bf16.mxu0 0
    %1022 = vmatpush1.bf16.msra.mxu0 %v1003
    %1023 = vmatprep.subr.bf16.mxu0 0
    %1024 = vmatpush1.bf16.msra.mxu0 %v1002
    %1025 = vmatprep.subr.bf16.mxu0 0
    %1026 = vmatpush1.bf16.msra.mxu0 %v1001
    %1027 = vmatprep.subr.bf16.mxu0 0
    %1028 = vmatpush1.bf16.msra.mxu0 %v1000
    %1029 = vmatprep.subr.bf16.mxu0 0
    %1030 = vmatpush1.bf16.msra.mxu0 %v999
    %1031 = vmatprep.subr.bf16.mxu0 0
    %1032 = vmatpush2.bf16.msra.mxu0 0
    %1033 = vmatprep.subr.bf16.mxu0 0
    %1034 = vmatpush2.bf16.msra.mxu0 0
    %1035 = vmatprep.subr.bf16.mxu0 0
    %1036 = vmatpush2.bf16.msra.mxu0 0
    %1037 = vmatprep.subr.bf16.mxu0 0
    %1038 = vmatpush2.bf16.msra.mxu0 0
    %1039 = vmatprep.subr.bf16.mxu0 0
    %1040 = vmatpush2.bf16.msra.mxu0 0
    %1041 = vmatprep.subr.bf16.mxu0 0
    %1042 = vmatpush2.bf16.msra.mxu0 0
    %1043 = vmatprep.subr.bf16.mxu0 0
    %1044 = vmatpush2.bf16.msra.mxu0 0
    %1045 = vmatprep.subr.bf16.mxu0 0
    %1046 = vmatpush2.bf16.msra.mxu0 0
    %1047 = vmatprep.mubr.bf16.mxu0 0
    %1048 = vmatmul.mubr.bf16.gmra.mxu0 %v943
    %v1049 = vpop.f32.mrf.mxu0
    %v1050 = vadd.f32 %v965, %v1049
    %v1051 = vpop.f32.mrf.mxu0
    %v1052 = vpop.f32.mrf.mxu0
    %v1053 = vpop.f32.mrf.mxu0
    %1054 = vdwg.mxu0
    %1055 = vst [vmem:[#allocation11] sm:$0xff] %v1050
    // Predicated region
    $region58: #{tpu_custom_call.1} parent=1 // pred_check
      _
    $region59: #{tpu_custom_call.1} parent=1 // pred_check_branch
      %1057 = sbr.rel (0) target = $region61
    $region60: #{tpu_custom_call.1} parent=1 // pred_region
      %s1059 = ssub.s32 128, 128
      %1060 = vsyncadd [#allocation4], %s1059
      %s1062 = sshll.u32 [#allocation11], 4
      %s1063 = int_to_ptr.vmem [resolvable:$true] %s1062
      %1065 = dma.vmem_to_hbm [thread:$0]  %s1063, 128, %s9, [#allocation4]
    $region61: #{tpu_custom_call.1} parent=1 // pred_fallthru
      _
    // Predicated region
    $region62: #{tpu_custom_call.1} parent=1 // pred_check
      _
    $region63: #{tpu_custom_call.1} parent=1 // pred_check_branch
      %1067 = sbr.rel (0) target = $region65
    $region64: #{tpu_custom_call.1} parent=1 // pred_region
      %1068 = dma.done [#allocation4], 128
    $region65: #{tpu_custom_call.1} parent=1 // pred_fallthru
      _
    %1069 = vsyncpa [#allocation3], 1
    %1070 = vsyncpa [#allocation6], 1
    %1071 = vsyncpa [#allocation9], 1
    %1072 = vsyncpa [#allocation4], 1

</llo_original>
